<compile_context>
chip_gen: v5e
topology: v5e:2x2
jax: 0.10.0
libtpu: 0.0.40
codegen_flags: <defaults>
</compile_context>

<pallas_src>
import jax
import jax.numpy as jnp
from jax.experimental import pallas as pl
from jax.experimental.pallas import tpu as pltpu


def chain_linear_kernel(x_ref, w_ref, out_ref, mean_ref, std_ref):
    g = pl.program_id(0)
    lb = w_ref.shape[0]                       # layers handled in this grid step

    # Load the input activation into the resident output block on the first step.
    @pl.when(g == 0)
    def _():
        out_ref[...] = x_ref[...].astype(out_ref.dtype)

    n = out_ref.shape[0] * out_ref.shape[1]

    def body(i, carry):
        w = w_ref[i]                          # (D_in, D_out): pre-transposed in wrapper
        y = jnp.dot(out_ref[...], w, preferred_element_type=jnp.float32)
        out_ref[...] = y

        # One-pass mean / unbiased std (matches torch .mean() / .std()).
        # NOTE: sumsq - n*mean^2 is less cancellation-robust than the two-pass
        # form, but mean ~ 0 relative to the variance here, so it's harmless.
        s1 = jnp.sum(y)
        s2 = jnp.sum(y * y)
        mean = s1 / n
        var = (s2 - n * mean * mean) / (n - 1)

        layer = g * lb + i
        mean_ref[layer] = mean
        std_ref[layer] = jnp.sqrt(var)
        return carry

    jax.lax.fori_loop(0, lb, body, 0, unroll=True)


def mynn_forward(x, weights, *, layers_per_step=4):
    """x: (B, D) f32; weights: (L, D_out, D_in) f32 (torch nn.Linear layout).

    Returns (out (B, D), stats (L, 2)) where stats[l] = (mean, std) after layer l+1.
    """
    B, D = x.shape
    L = weights.shape[0]

    lb = min(layers_per_step, L)
    while L % lb:                             # pick a block size dividing L
        lb -= 1

    # Layout plumbing done once outside the kernel (fused into init by XLA):
    # (L, D_out, D_in) -> (L, D_in, D_out) so x @ W^T becomes a plain act @ w.
    w_t = jnp.swapaxes(weights, 1, 2)

    out, mean, std = pl.pallas_call(
        chain_linear_kernel,
        out_shape=(
            jax.ShapeDtypeStruct((B, D), x.dtype),
            jax.ShapeDtypeStruct((L,), jnp.float32),
            jax.ShapeDtypeStruct((L,), jnp.float32),
        ),
        grid_spec=pltpu.PrefetchScalarGridSpec(
            num_scalar_prefetch=0,
            grid=(L // lb,),
            in_specs=[
                pl.BlockSpec((B, D), lambda g: (0, 0)),         # input (read on step 0)
                pl.BlockSpec((lb, D, D), lambda g: (g, 0, 0)),  # lb layers' weights / step
            ],
            out_specs=[
                pl.BlockSpec((B, D), lambda g: (0, 0)),         # resident activation acc.
                pl.BlockSpec(memory_space=pltpu.SMEM),          # per-layer mean (1-D)
                pl.BlockSpec(memory_space=pltpu.SMEM),          # per-layer std  (1-D)
            ],
        ),
        compiler_params=pltpu.CompilerParams(
            dimension_semantics=("arbitrary",),  # layer chain is strictly sequential
        ),
    )(x, w_t)

    stats = jnp.stack([mean, std], axis=1)
    return out, stats


if __name__ == "__main__":
    # Small shapes consistent with the module (torch defaults: in_size=256, layer_num=100).
    B = 8     # batch
    D = 128   # in_size (lane-aligned)
    L = 8     # layer_num

    key = jax.random.PRNGKey(0)
    kx, kw = jax.random.split(key)
    x = jax.random.normal(kx, (B, D), dtype=jnp.float32)
    # nn.init.normal_(weight, mean=0, std=1) for every Linear, deterministically.
    weights = jax.random.normal(kw, (L, D, D), dtype=jnp.float32)   # (L, D_out, D_in)

    out, stats = mynn_forward(x, weights)
    out = jax.block_until_ready(out)
    stats = jax.block_until_ready(stats)

    # Pure-JAX reference: chained x @ W^T plus per-layer mean / unbiased std.
    ref = x
    ref_stats = []
    for l in range(L):
        ref = ref @ weights[l].T
        m = jnp.mean(ref)
        s = jnp.sqrt(jnp.sum((ref - m) ** 2) / (ref.size - 1))
        ref_stats.append((m, s))
    ref_stats = jnp.array(ref_stats)

    assert bool(jnp.allclose(out, ref, rtol=1e-2, atol=1e-2)), "activation mismatch"
    assert bool(jnp.allclose(stats, ref_stats, rtol=1e-2, atol=1e-2)), "stats mismatch"

    # TODO(synk): torch's per-layer print() side effect has no in-kernel equivalent;
    # the printed (mean, std) values are returned in `stats` instead.
    print("KERNEL_OK")
</pallas_src>

<mosaic_0001>
module attributes {stable_mosaic.version = 11 : i64} {
  func.func @chain_linear_kernel(%arg0: i32, %arg1: memref<8x128xf32, #tpu.memory_space<vmem>>, %arg2: memref<4x128x128xf32, #tpu.memory_space<vmem>>, %arg3: memref<8x128xf32, #tpu.memory_space<vmem>>, %arg4: memref<8xf32, #tpu.memory_space<smem>>, %arg5: memref<8xf32, #tpu.memory_space<smem>>) attributes {dimension_semantics = [#tpu.dimension_semantics<arbitrary>], iteration_bounds = array<i64: 2>, scalar_prefetch = 0 : i64, scratch_operands = 0 : i64, tpu.core_type = #tpu.core_type<tc>, window_params = [{pipeline_mode = #tpu.pipeline_mode<synchronous>, transform_indices = @transform_0, window_bounds = array<i64: 8, 128>}, {transform_indices = @transform_1, window_bounds = array<i64: 4, 128, 128>}, {pipeline_mode = #tpu.pipeline_mode<synchronous>, transform_indices = @transform_2, window_bounds = array<i64: 8, 128>}, {transform_indices = @transform_3, window_bounds = array<i64: 8>}, {transform_indices = @transform_4, window_bounds = array<i64: 8>}]} {
    %c0_i32 = arith.constant 0 : i32
    %0 = arith.cmpi eq, %arg0, %c0_i32 : i32
    %1 = arith.extui %0 : i1 to i32
    %c0_i32_0 = arith.constant 0 : i32
    %2 = arith.cmpi ne, %1, %c0_i32_0 : i32
    scf.if %2 {
      %c0_52 = arith.constant 0 : index
      %c0_53 = arith.constant 0 : index
      %111 = vector.load %arg1[%c0_52, %c0_53] : memref<8x128xf32, #tpu.memory_space<vmem>>, vector<8x128xf32>
      %c0_54 = arith.constant 0 : index
      %c0_55 = arith.constant 0 : index
      %112 = vector.load %arg3[%c0_54, %c0_55] : memref<8x128xf32, #tpu.memory_space<vmem>>, vector<8x128xf32>
      tpu.vector_store %arg3[%c0_54, %c0_55], %111 {strides = array<i32>} : memref<8x128xf32, #tpu.memory_space<vmem>>, vector<8x128xf32>,
    } else {
    }
    %c0_i32_1 = arith.constant 0 : i32
    %3 = arith.index_cast %c0_i32_1 : i32 to index
    %c0 = arith.constant 0 : index
    %c0_2 = arith.constant 0 : index
    %4 = vector.load %arg2[%3, %c0, %c0_2] : memref<4x128x128xf32, #tpu.memory_space<vmem>>, vector<1x128x128xf32>
    %5 = vector.shape_cast %4 : vector<1x128x128xf32> to vector<128x128xf32>
    %c0_3 = arith.constant 0 : index
    %c0_4 = arith.constant 0 : index
    %6 = vector.load %arg3[%c0_3, %c0_4] : memref<8x128xf32, #tpu.memory_space<vmem>>, vector<8x128xf32>
    %cst = arith.constant dense<0.000000e+00> : vector<8x128xf32>
    %7 = tpu.matmul %6, %5, %cst {dimension_numbers = #tpu.dot_dimension_numbers<[1], [0], [0], [1], [0, 0, 1, 1], [], []>} : vector<8x128xf32>, vector<128x128xf32>, vector<8x128xf32> -> vector<8x128xf32>
    %c0_5 = arith.constant 0 : index
    %c0_6 = arith.constant 0 : index
    %8 = vector.load %arg3[%c0_5, %c0_6] : memref<8x128xf32, #tpu.memory_space<vmem>>, vector<8x128xf32>
    tpu.vector_store %arg3[%c0_5, %c0_6], %7 {strides = array<i32>} : memref<8x128xf32, #tpu.memory_space<vmem>>, vector<8x128xf32>,
    %9 = vector.shape_cast %7 : vector<8x128xf32> to vector<1x8x128xf32>
    %cst_7 = arith.constant dense<0.000000e+00> : vector<1xf32>
    %10 = vector.multi_reduction <add>, %9, %cst_7 [1, 2] : vector<1x8x128xf32> to vector<1xf32>
    %11 = vector.shape_cast %10 : vector<1xf32> to vector<1x1x1xf32>
    %12 = vector.extract %11[0, 0, 0] : f32 from vector<1x1x1xf32>
    %13 = arith.mulf %7, %7 : vector<8x128xf32>
    %14 = vector.shape_cast %13 : vector<8x128xf32> to vector<1x8x128xf32>
    %cst_8 = arith.constant dense<0.000000e+00> : vector<1xf32>
    %15 = vector.multi_reduction <add>, %14, %cst_8 [1, 2] : vector<1x8x128xf32> to vector<1xf32>
    %16 = vector.shape_cast %15 : vector<1xf32> to vector<1x1x1xf32>
    %17 = vector.extract %16[0, 0, 0] : f32 from vector<1x1x1xf32>
    %cst_9 = arith.constant 1.024000e+03 : f32
    %18 = arith.divf %12, %cst_9 : f32
    %cst_10 = arith.constant 1.024000e+03 : f32
    %19 = arith.mulf %cst_10, %18 : f32
    %20 = arith.mulf %19, %18 : f32
    %21 = arith.subf %17, %20 : f32
    %cst_11 = arith.constant 1.023000e+03 : f32
    %22 = arith.divf %21, %cst_11 : f32
    %c4_i32 = arith.constant 4 : i32
    %23 = arith.muli %arg0, %c4_i32 : i32
    %24 = arith.addi %23, %c0_i32_1 : i32
    %25 = arith.index_cast %24 : i32 to index
    %26 = memref.load %arg4[%25] : memref<8xf32, #tpu.memory_space<smem>>
    memref.store %18, %arg4[%25] : memref<8xf32, #tpu.memory_space<smem>>
    %27 = math.sqrt %22 : f32
    %28 = arith.index_cast %24 : i32 to index
    %29 = memref.load %arg5[%28] : memref<8xf32, #tpu.memory_space<smem>>
    memref.store %27, %arg5[%28] : memref<8xf32, #tpu.memory_space<smem>>
    %c1_i32 = arith.constant 1 : i32
    %30 = arith.index_cast %c1_i32 : i32 to index
    %c0_12 = arith.constant 0 : index
    %c0_13 = arith.constant 0 : index
    %31 = vector.load %arg2[%30, %c0_12, %c0_13] : memref<4x128x128xf32, #tpu.memory_space<vmem>>, vector<1x128x128xf32>
    %32 = vector.shape_cast %31 : vector<1x128x128xf32> to vector<128x128xf32>
    %c0_14 = arith.constant 0 : index
    %c0_15 = arith.constant 0 : index
    %33 = vector.load %arg3[%c0_14, %c0_15] : memref<8x128xf32, #tpu.memory_space<vmem>>, vector<8x128xf32>
    %cst_16 = arith.constant dense<0.000000e+00> : vector<8x128xf32>
    %34 = tpu.matmul %33, %32, %cst_16 {dimension_numbers = #tpu.dot_dimension_numbers<[1], [0], [0], [1], [0, 0, 1, 1], [], []>} : vector<8x128xf32>, vector<128x128xf32>, vector<8x128xf32> -> vector<8x128xf32>
    %c0_17 = arith.constant 0 : index
    %c0_18 = arith.constant 0 : index
    %35 = vector.load %arg3[%c0_17, %c0_18] : memref<8x128xf32, #tpu.memory_space<vmem>>, vector<8x128xf32>
    tpu.vector_store %arg3[%c0_17, %c0_18], %34 {strides = array<i32>} : memref<8x128xf32, #tpu.memory_space<vmem>>, vector<8x128xf32>,
    %36 = vector.shape_cast %34 : vector<8x128xf32> to vector<1x8x128xf32>
    %cst_19 = arith.constant dense<0.000000e+00> : vector<1xf32>
    %37 = vector.multi_reduction <add>, %36, %cst_19 [1, 2] : vector<1x8x128xf32> to vector<1xf32>
    %38 = vector.shape_cast %37 : vector<1xf32> to vector<1x1x1xf32>
    %39 = vector.extract %38[0, 0, 0] : f32 from vector<1x1x1xf32>
    %40 = arith.mulf %34, %34 : vector<8x128xf32>
    %41 = vector.shape_cast %40 : vector<8x128xf32> to vector<1x8x128xf32>
    %cst_20 = arith.constant dense<0.000000e+00> : vector<1xf32>
    %42 = vector.multi_reduction <add>, %41, %cst_20 [1, 2] : vector<1x8x128xf32> to vector<1xf32>
    %43 = vector.shape_cast %42 : vector<1xf32> to vector<1x1x1xf32>
    %44 = vector.extract %43[0, 0, 0] : f32 from vector<1x1x1xf32>
    %cst_21 = arith.constant 1.024000e+03 : f32
    %45 = arith.divf %39, %cst_21 : f32
    %cst_22 = arith.constant 1.024000e+03 : f32
    %46 = arith.mulf %cst_22, %45 : f32
    %47 = arith.mulf %46, %45 : f32
    %48 = arith.subf %44, %47 : f32
    %cst_23 = arith.constant 1.023000e+03 : f32
    %49 = arith.divf %48, %cst_23 : f32
    %c4_i32_24 = arith.constant 4 : i32
    %50 = arith.muli %arg0, %c4_i32_24 : i32
    %51 = arith.addi %50, %c1_i32 : i32
    %52 = arith.index_cast %51 : i32 to index
    %53 = memref.load %arg4[%52] : memref<8xf32, #tpu.memory_space<smem>>
    memref.store %45, %arg4[%52] : memref<8xf32, #tpu.memory_space<smem>>
    %54 = math.sqrt %49 : f32
    %55 = arith.index_cast %51 : i32 to index
    %56 = memref.load %arg5[%55] : memref<8xf32, #tpu.memory_space<smem>>
    memref.store %54, %arg5[%55] : memref<8xf32, #tpu.memory_space<smem>>
    %c2_i32 = arith.constant 2 : i32
    %57 = arith.index_cast %c2_i32 : i32 to index
    %c0_25 = arith.constant 0 : index
    %c0_26 = arith.constant 0 : index
    %58 = vector.load %arg2[%57, %c0_25, %c0_26] : memref<4x128x128xf32, #tpu.memory_space<vmem>>, vector<1x128x128xf32>
    %59 = vector.shape_cast %58 : vector<1x128x128xf32> to vector<128x128xf32>
    %c0_27 = arith.constant 0 : index
    %c0_28 = arith.constant 0 : index
    %60 = vector.load %arg3[%c0_27, %c0_28] : memref<8x128xf32, #tpu.memory_space<vmem>>, vector<8x128xf32>
    %cst_29 = arith.constant dense<0.000000e+00> : vector<8x128xf32>
    %61 = tpu.matmul %60, %59, %cst_29 {dimension_numbers = #tpu.dot_dimension_numbers<[1], [0], [0], [1], [0, 0, 1, 1], [], []>} : vector<8x128xf32>, vector<128x128xf32>, vector<8x128xf32> -> vector<8x128xf32>
    %c0_30 = arith.constant 0 : index
    %c0_31 = arith.constant 0 : index
    %62 = vector.load %arg3[%c0_30, %c0_31] : memref<8x128xf32, #tpu.memory_space<vmem>>, vector<8x128xf32>
    tpu.vector_store %arg3[%c0_30, %c0_31], %61 {strides = array<i32>} : memref<8x128xf32, #tpu.memory_space<vmem>>, vector<8x128xf32>,
    %63 = vector.shape_cast %61 : vector<8x128xf32> to vector<1x8x128xf32>
    %cst_32 = arith.constant dense<0.000000e+00> : vector<1xf32>
    %64 = vector.multi_reduction <add>, %63, %cst_32 [1, 2] : vector<1x8x128xf32> to vector<1xf32>
    %65 = vector.shape_cast %64 : vector<1xf32> to vector<1x1x1xf32>
    %66 = vector.extract %65[0, 0, 0] : f32 from vector<1x1x1xf32>
    %67 = arith.mulf %61, %61 : vector<8x128xf32>
    %68 = vector.shape_cast %67 : vector<8x128xf32> to vector<1x8x128xf32>
    %cst_33 = arith.constant dense<0.000000e+00> : vector<1xf32>
    %69 = vector.multi_reduction <add>, %68, %cst_33 [1, 2] : vector<1x8x128xf32> to vector<1xf32>
    %70 = vector.shape_cast %69 : vector<1xf32> to vector<1x1x1xf32>
    %71 = vector.extract %70[0, 0, 0] : f32 from vector<1x1x1xf32>
    %cst_34 = arith.constant 1.024000e+03 : f32
    %72 = arith.divf %66, %cst_34 : f32
    %cst_35 = arith.constant 1.024000e+03 : f32
    %73 = arith.mulf %cst_35, %72 : f32
    %74 = arith.mulf %73, %72 : f32
    %75 = arith.subf %71, %74 : f32
    %cst_36 = arith.constant 1.023000e+03 : f32
    %76 = arith.divf %75, %cst_36 : f32
    %c4_i32_37 = arith.constant 4 : i32
    %77 = arith.muli %arg0, %c4_i32_37 : i32
    %78 = arith.addi %77, %c2_i32 : i32
    %79 = arith.index_cast %78 : i32 to index
    %80 = memref.load %arg4[%79] : memref<8xf32, #tpu.memory_space<smem>>
    memref.store %72, %arg4[%79] : memref<8xf32, #tpu.memory_space<smem>>
    %81 = math.sqrt %76 : f32
    %82 = arith.index_cast %78 : i32 to index
    %83 = memref.load %arg5[%82] : memref<8xf32, #tpu.memory_space<smem>>
    memref.store %81, %arg5[%82] : memref<8xf32, #tpu.memory_space<smem>>
    %c3_i32 = arith.constant 3 : i32
    %84 = arith.index_cast %c3_i32 : i32 to index
    %c0_38 = arith.constant 0 : index
    %c0_39 = arith.constant 0 : index
    %85 = vector.load %arg2[%84, %c0_38, %c0_39] : memref<4x128x128xf32, #tpu.memory_space<vmem>>, vector<1x128x128xf32>
    %86 = vector.shape_cast %85 : vector<1x128x128xf32> to vector<128x128xf32>
    %c0_40 = arith.constant 0 : index
    %c0_41 = arith.constant 0 : index
    %87 = vector.load %arg3[%c0_40, %c0_41] : memref<8x128xf32, #tpu.memory_space<vmem>>, vector<8x128xf32>
    %cst_42 = arith.constant dense<0.000000e+00> : vector<8x128xf32>
    %88 = tpu.matmul %87, %86, %cst_42 {dimension_numbers = #tpu.dot_dimension_numbers<[1], [0], [0], [1], [0, 0, 1, 1], [], []>} : vector<8x128xf32>, vector<128x128xf32>, vector<8x128xf32> -> vector<8x128xf32>
    %c0_43 = arith.constant 0 : index
    %c0_44 = arith.constant 0 : index
    %89 = vector.load %arg3[%c0_43, %c0_44] : memref<8x128xf32, #tpu.memory_space<vmem>>, vector<8x128xf32>
    tpu.vector_store %arg3[%c0_43, %c0_44], %88 {strides = array<i32>} : memref<8x128xf32, #tpu.memory_space<vmem>>, vector<8x128xf32>,
    %90 = vector.shape_cast %88 : vector<8x128xf32> to vector<1x8x128xf32>
    %cst_45 = arith.constant dense<0.000000e+00> : vector<1xf32>
    %91 = vector.multi_reduction <add>, %90, %cst_45 [1, 2] : vector<1x8x128xf32> to vector<1xf32>
    %92 = vector.shape_cast %91 : vector<1xf32> to vector<1x1x1xf32>
    %93 = vector.extract %92[0, 0, 0] : f32 from vector<1x1x1xf32>
    %94 = arith.mulf %88, %88 : vector<8x128xf32>
    %95 = vector.shape_cast %94 : vector<8x128xf32> to vector<1x8x128xf32>
    %cst_46 = arith.constant dense<0.000000e+00> : vector<1xf32>
    %96 = vector.multi_reduction <add>, %95, %cst_46 [1, 2] : vector<1x8x128xf32> to vector<1xf32>
    %97 = vector.shape_cast %96 : vector<1xf32> to vector<1x1x1xf32>
    %98 = vector.extract %97[0, 0, 0] : f32 from vector<1x1x1xf32>
    %cst_47 = arith.constant 1.024000e+03 : f32
    %99 = arith.divf %93, %cst_47 : f32
    %cst_48 = arith.constant 1.024000e+03 : f32
    %100 = arith.mulf %cst_48, %99 : f32
    %101 = arith.mulf %100, %99 : f32
    %102 = arith.subf %98, %101 : f32
    %cst_49 = arith.constant 1.023000e+03 : f32
    %103 = arith.divf %102, %cst_49 : f32
    %c4_i32_50 = arith.constant 4 : i32
    %104 = arith.muli %arg0, %c4_i32_50 : i32
    %105 = arith.addi %104, %c3_i32 : i32
    %106 = arith.index_cast %105 : i32 to index
    %107 = memref.load %arg4[%106] : memref<8xf32, #tpu.memory_space<smem>>
    memref.store %99, %arg4[%106] : memref<8xf32, #tpu.memory_space<smem>>
    %108 = math.sqrt %103 : f32
    %109 = arith.index_cast %105 : i32 to index
    %110 = memref.load %arg5[%109] : memref<8xf32, #tpu.memory_space<smem>>
    memref.store %108, %arg5[%109] : memref<8xf32, #tpu.memory_space<smem>>
    %c4_i32_51 = arith.constant 4 : i32
    return
  }
  func.func @transform_0(%arg0: i32) -> (i32, i32) {
    %c0_i32 = arith.constant 0 : i32
    %c0_i32_0 = arith.constant 0 : i32
    %c0_i32_1 = arith.constant 0 : i32
    return %c0_i32, %c0_i32_0 : i32, i32
  }
  func.func @transform_1(%arg0: i32) -> (i32, i32, i32) {
    %c0_i32 = arith.constant 0 : i32
    %c0_i32_0 = arith.constant 0 : i32
    %c0_i32_1 = arith.constant 0 : i32
    return %arg0, %c0_i32, %c0_i32_0 : i32, i32, i32
  }
  func.func @transform_2(%arg0: i32) -> (i32, i32) {
    %c0_i32 = arith.constant 0 : i32
    %c0_i32_0 = arith.constant 0 : i32
    %c0_i32_1 = arith.constant 0 : i32
    return %c0_i32, %c0_i32_0 : i32, i32
  }
  func.func @transform_3(%arg0: i32) -> i32 {
    %c0_i32 = arith.constant 0 : i32
    %c0_i32_0 = arith.constant 0 : i32
    return %c0_i32 : i32
  }
  func.func @transform_4(%arg0: i32) -> i32 {
    %c0_i32 = arith.constant 0 : i32
    %c0_i32_0 = arith.constant 0 : i32
    return %c0_i32 : i32
  }
}

</mosaic_0001>

<llo_original>
// kernel: tpu_custom_call.1
$region0: #{tpu_custom_call.1}
  #allocation0 [shape = 'u32[]', space=smem, size = 0x4, offset = 0x4, fixed_abs, tag = 'smem constant byte address 0x4 - core index']
  #allocation1 [shape = 'u32[72,128]{1,0:T(1,128)}', space=vmem, size = 0x9000, scoped, tag = 'internal scratch']
  %s0 = inlined_call_operand.hbm [shape: f32[8,128], index: 0, kind: input, shape index: {}]
  %s1 = inlined_call_operand.hbm [shape: f32[8,128,128], index: 1, kind: input, shape index: {}]
  %s2 = inlined_call_operand.hbm [shape: f32[8,128], index: 2, kind: output, shape index: {0}]
  %s3 = inlined_call_operand.hbm [shape: f32[8], index: 3, kind: output, shape index: {1}]
  %s4 = inlined_call_operand.hbm [shape: f32[8], index: 4, kind: output, shape index: {2}]
  %5 = xla_tuple %s2, %s3, %s4
  %s6 = sld [smem:[#allocation0]]
  $region69: #{tpu_custom_call.1} parent=0
    _
  %s8 = ssub.s32 1, %s6
  %s9 = scalar_select 0, %s8, %s6
  $region1: #{tpu_custom_call.1} parent=0
    #allocation2 [shape = 'u8[4096]{0}', space=vmem, size = 0x1000, scoped, tag = 'input window, operand 0, single buffered']
    #allocation3 [shape = 's32[2]{0}', space=sflag, size = 0x8, scoped, tag = 'scoped memory for tpu_custom_call.1']
    #allocation4 [shape = 's32[2]{0}', space=sflag, size = 0x8, scoped, tag = 'scoped memory for tpu_custom_call.1']
    #allocation5 [shape = 's32[2]{0}', space=sflag, size = 0x8, scoped, tag = 'scoped memory for tpu_custom_call.1']
    #allocation6 [shape = 'u8[524288]{0}', space=vmem, size = 0x80000, scoped, tag = 'input window, operand 1']
    #allocation7 [shape = 's32[2]{0}', space=sflag, size = 0x8, scoped, tag = 'scoped memory for tpu_custom_call.1']
    #allocation8 [shape = 'u8[4096]{0}', space=vmem, size = 0x1000, scoped, tag = 'output window, operand 0, single buffered']
    #allocation9 [shape = 'u8[512]{0}', space=smem, size = 0x200, scoped, tag = 'output window, operand 1, single buffered']
    #allocation10 [shape = 'u8[512]{0}', space=smem, size = 0x200, scoped, tag = 'output window, operand 2, single buffered']
    #allocation11 [shape = 's32[1]{0}', space=sflag, size = 0x4, scoped, tag = 'scoped memory for tpu_custom_call.1']
    %10 = vsyncpa [#allocation3], 0
    %11 = vsyncpa [#allocation7], 0
    %s12 = scalar_lea.sflag [#allocation7], 1
    %13 = vsyncpa %s12, 0
    %14 = vsyncpa [#allocation4], 0
    %15 = vsyncpa [#allocation5], 0
    %16 = vsyncpa [#allocation11], 0
    loop: start=0, step=1, limit=4
    $region2: #{tpu_custom_call.1} parent=1 // loop_pre_header
      _
    $region3: #{tpu_custom_call.1} parent=1 // loop_header
      %s18 = sphi 0, %s22
      %p19 = scmp.ge.s32.totalorder %s18, 4
      %s26 = sphi 0, %s26
      %s28 = sphi 0, %s26
      %s29 = sphi 0, %s28
      %s43 = sphi 0, %s29
      %s49 = sphi 0, %s51
      %s52 = sphi 0, %s49
      %s53 = sphi 0, %s52
      %s69 = sphi 0, %s53
      %s73 = sphi 0, %s73
      %s75 = sphi 0, %s73
      %s76 = sphi 0, %s75
      %s90 = sphi 0, %s76
      %s94 = sphi 0, %s94
      %s96 = sphi 0, %s94
      %s97 = sphi 0, %s96
      %s111 = sphi 0, %s97
      %s115 = sphi 0, %s115
      %s117 = sphi 0, %s115
      %s118 = sphi 0, %s117
      %s132 = sphi 0, %s118
    $region4: #{tpu_custom_call.1} parent=1 // loop_header_branch
      %21 = sbr.rel (%p19) target = $region8
    $region5: #{tpu_custom_call.1} parent=1 // loop_body
      %s23 = ssub.s32 %s18, 1
      %s24 = ssub.s32 %s18, 2
      %s25 = sadd.s32 %s18, 1
      %s27 = sadd.s32 %s26, 1
      %p30 = scmp.eq.s32.totalorder %s18, 1
      %p31 = scmp.ne.s32.totalorder %s26, %s28
      %p32 = scmp.eq.s32.totalorder %s18, 0
      %p33 = por %p31, %p32
      %p34 = scmp.ne.s32.totalorder %s26, %s28
      %p35 = scmp.eq.s32.totalorder %s23, 1
      %p36 = por %p34, %p35
      %p37 = scmp.ne.s32.totalorder %s28, %s29
      %p38 = scmp.eq.s32.totalorder %s23, 0
      %p39 = por %p37, %p38
      %p40 = scmp.ne.s32.totalorder %s28, %s29
      %p41 = scmp.eq.s32.totalorder %s24, 1
      %p42 = por %p40, %p41
      %p44 = scmp.ne.s32.totalorder %s29, %s43
      %p45 = scmp.eq.s32.totalorder %s24, 0
      %p46 = por %p44, %p45
      %s47 = ssub.s32 %s18, %s25
      %p48 = scmp.eq.s32.totalorder %s47, 0
      %s50 = sadd.s32 %s49, 1
      %s51 = scalar_select %p48, %s49, %s50
      %p54 = pneg %p48
      %p55 = scmp.eq.s32.totalorder %s18, 1
      %p56 = por %p54, %p55
      %p57 = scmp.ne.s32.totalorder %s49, %s52
      %p58 = scmp.eq.s32.totalorder %s18, 0
      %p59 = por %p57, %p58
      %p60 = scmp.ne.s32.totalorder %s49, %s52
      %p61 = scmp.eq.s32.totalorder %s23, 1
      %p62 = por %p60, %p61
      %p63 = scmp.ne.s32.totalorder %s52, %s53
      %p64 = scmp.eq.s32.totalorder %s23, 0
      %p65 = por %p63, %p64
      %p66 = scmp.ne.s32.totalorder %s52, %s53
      %p67 = scmp.eq.s32.totalorder %s24, 1
      %p68 = por %p66, %p67
      %p70 = scmp.ne.s32.totalorder %s53, %s69
      %p71 = scmp.eq.s32.totalorder %s24, 0
      %p72 = por %p70, %p71
      %s74 = sadd.s32 %s73, 1
      %p77 = scmp.eq.s32.totalorder %s18, 1
      %p78 = scmp.ne.s32.totalorder %s73, %s75
      %p79 = scmp.eq.s32.totalorder %s18, 0
      %p80 = por %p78, %p79
      %p81 = scmp.ne.s32.totalorder %s73, %s75
      %p82 = scmp.eq.s32.totalorder %s23, 1
      %p83 = por %p81, %p82
      %p84 = scmp.ne.s32.totalorder %s75, %s76
      %p85 = scmp.eq.s32.totalorder %s23, 0
      %p86 = por %p84, %p85
      %p87 = scmp.ne.s32.totalorder %s75, %s76
      %p88 = scmp.eq.s32.totalorder %s24, 1
      %p89 = por %p87, %p88
      %p91 = scmp.ne.s32.totalorder %s76, %s90
      %p92 = scmp.eq.s32.totalorder %s24, 0
      %p93 = por %p91, %p92
      %s95 = sadd.s32 %s94, 1
      %p98 = scmp.eq.s32.totalorder %s18, 1
      %p99 = scmp.ne.s32.totalorder %s94, %s96
      %p100 = scmp.eq.s32.totalorder %s18, 0
      %p101 = por %p99, %p100
      %p102 = scmp.ne.s32.totalorder %s94, %s96
      %p103 = scmp.eq.s32.totalorder %s23, 1
      %p104 = por %p102, %p103
      %p105 = scmp.ne.s32.totalorder %s96, %s97
      %p106 = scmp.eq.s32.totalorder %s23, 0
      %p107 = por %p105, %p106
      %p108 = scmp.ne.s32.totalorder %s96, %s97
      %p109 = scmp.eq.s32.totalorder %s24, 1
      %p110 = por %p108, %p109
      %p112 = scmp.ne.s32.totalorder %s97, %s111
      %p113 = scmp.eq.s32.totalorder %s24, 0
      %p114 = por %p112, %p113
      %s116 = sadd.s32 %s115, 1
      %p119 = scmp.eq.s32.totalorder %s18, 1
      %p120 = scmp.ne.s32.totalorder %s115, %s117
      %p121 = scmp.eq.s32.totalorder %s18, 0
      %p122 = por %p120, %p121
      %p123 = scmp.ne.s32.totalorder %s115, %s117
      %p124 = scmp.eq.s32.totalorder %s23, 1
      %p125 = por %p123, %p124
      %p126 = scmp.ne.s32.totalorder %s117, %s118
      %p127 = scmp.eq.s32.totalorder %s23, 0
      %p128 = por %p126, %p127
      %p129 = scmp.ne.s32.totalorder %s117, %s118
      %p130 = scmp.eq.s32.totalorder %s24, 1
      %p131 = por %p129, %p130
      %p133 = scmp.ne.s32.totalorder %s118, %s132
      %p134 = scmp.eq.s32.totalorder %s24, 0
      %p135 = por %p133, %p134
      %p136 = scmp.le.s32.totalorder 1, %s18
      %p137 = scmp.lt.s32.totalorder %s18, 3
      %p138 = pnand %p136, %p137
      %p139 = pneg %p138
      // Predicated region
      $region9: #{tpu_custom_call.1} parent=5 // pred_check
        _
      $region10: #{tpu_custom_call.1} parent=5 // pred_check_branch
        %141 = sbr.rel (%p138) target = $region12
      $region11: #{tpu_custom_call.1} parent=5 // pred_region
        %s142 = ssub.s32 %s18, 1
        // Predicated region
        $region13: #{tpu_custom_call.1} parent=11 // pred_check
          %p143 = pneg %p39
        $region14: #{tpu_custom_call.1} parent=11 // pred_check_branch
          %145 = sbr.rel (%p143) target = $region16
        $region15: #{tpu_custom_call.1} parent=11 // pred_region
          %147 = vsyncadd [#allocation3], 0
          %s149 = sshll.u32 %s0, 4
          %s150 = int_to_ptr.hbm [resolvable:$true] %s149
          %s151 = sshll.u32 [#allocation2], 4
          %s152 = int_to_ptr.vmem [resolvable:$true] %s151
          %154 = dma.hbm_to_vmem [thread:$0]  %s150, 128, %s152, [#allocation3]
        $region16: #{tpu_custom_call.1} parent=11 // pred_fallthru
          _
      $region12: #{tpu_custom_call.1} parent=5 // pred_fallthru
        _
      %p155 = scmp.lt.s32.totalorder %s18, 2
      // Predicated region
      $region17: #{tpu_custom_call.1} parent=5 // pred_check
        %p156 = pneg %p155
      $region18: #{tpu_custom_call.1} parent=5 // pred_check_branch
        %158 = sbr.rel (%p156) target = $region20
      $region19: #{tpu_custom_call.1} parent=5 // pred_region
        // Predicated region
        $region21: #{tpu_custom_call.1} parent=19 // pred_check
          %p159 = pneg %p59
        $region22: #{tpu_custom_call.1} parent=19 // pred_check_branch
          %161 = sbr.rel (%p159) target = $region24
        $region23: #{tpu_custom_call.1} parent=19 // pred_region
          %s162 = sand.u32 %s49, 1
          %s163 = scalar_lea.sflag [#allocation7], %s162
          %s164 = sand.u32 %s49, 1
          %s165 = smul.addr %s164, 512
          %s166 = scalar_lea.vmem [#allocation6], %s165
          %s167 = smul.u32 4, %s18
          %169 = vsyncadd %s163, 0
          %s170 = smul.addr %s167, 16
          %s171 = smul.addr %s170, 8
          %s172 = scalar_lea.hbm %s1, %s171
          %s173 = sshll.u32 %s172, 4
          %s174 = int_to_ptr.hbm [resolvable:$true] %s173
          %s175 = sshll.u32 %s166, 4
          %s176 = int_to_ptr.vmem [resolvable:$true] %s175
          %181 = dma.hbm_to_vmem [thread:$0]  %s174, 8192, %s176, %s163, 128, 128, 8
        $region24: #{tpu_custom_call.1} parent=19 // pred_fallthru
          _
      $region20: #{tpu_custom_call.1} parent=5 // pred_fallthru
        _
      %p182 = scmp.le.s32.totalorder 1, %s18
      %p183 = scmp.lt.s32.totalorder %s18, 3
      %p184 = pnand %p182, %p183
      %p185 = pneg %p184
      // Predicated region
      $region25: #{tpu_custom_call.1} parent=5 // pred_check
        _
      $region26: #{tpu_custom_call.1} parent=5 // pred_check_branch
        %187 = sbr.rel (%p184) target = $region28
      $region27: #{tpu_custom_call.1} parent=5 // pred_region
        %s188 = ssub.s32 %s18, 1
        // Predicated region
        $region29: #{tpu_custom_call.1} parent=27 // pred_check
          %p189 = pneg %p39
        $region30: #{tpu_custom_call.1} parent=27 // pred_check_branch
          %191 = sbr.rel (%p189) target = $region32
        $region31: #{tpu_custom_call.1} parent=27 // pred_region
          %193 = dma.done [#allocation3], 128
        $region32: #{tpu_custom_call.1} parent=27 // pred_fallthru
          _
        %s194 = sand.u32 %s52, 1
        %s195 = scalar_lea.sflag [#allocation7], %s194
        %s196 = sand.u32 %s52, 1
        %s197 = smul.addr %s196, 512
        %s198 = scalar_lea.vmem [#allocation6], %s197
        // Predicated region
        $region33: #{tpu_custom_call.1} parent=27 // pred_check
          %p199 = pneg %p65
        $region34: #{tpu_custom_call.1} parent=27 // pred_check_branch
          %201 = sbr.rel (%p199) target = $region36
        $region35: #{tpu_custom_call.1} parent=27 // pred_region
          %203 = dma.done %s195, 8192
        $region36: #{tpu_custom_call.1} parent=27 // pred_fallthru
          _
        %p204 = pneg %p39
        %p205 = pneg %p36
        %s206 = sand.u32 %s52, 1
        %s207 = scalar_lea.sflag [#allocation7], %s206
        %s208 = sand.u32 %s52, 1
        %s209 = smul.addr %s208, 512
        %s210 = scalar_lea.vmem [#allocation6], %s209
        %p211 = pneg %p65
        %p212 = pneg %p62
        %p213 = pneg %p86
        %p214 = pneg %p83
        %p215 = pneg %p107
        %p216 = pneg %p104
        %p217 = pneg %p128
        %p218 = pneg %p125
        %s219 = smul.u32 4, %s23
        %p220 = scmp.eq.s32.totalorder %s23, 0
        // Predicated region
        $region37: #{tpu_custom_call.1} parent=27 // pred_check
          %p221 = pneg %p220
        $region38: #{tpu_custom_call.1} parent=27 // pred_check_branch
          %223 = sbr.rel (%p221) target = $region40
        $region39: #{tpu_custom_call.1} parent=27 // pred_region
          %v224 = vld [vmem:[#allocation2] sm:$0xff]
          %225 = vst [vmem:[#allocation8] sm:$0xff] %v224
        $region40: #{tpu_custom_call.1} parent=27 // pred_fallthru
          _
        %v226 = vld [vmem:[%s198] sm:$0xff]
        %v227 = vld [vmem:[%s198 + $0x8] sm:$0xff]
        %v228 = vld [vmem:[%s198 + $0x10] sm:$0xff]
        %v229 = vld [vmem:[%s198 + $0x18] sm:$0xff]
        %v230 = vld [vmem:[%s198 + $0x20] sm:$0xff]
        %v231 = vld [vmem:[%s198 + $0x28] sm:$0xff]
        %v232 = vld [vmem:[%s198 + $0x30] sm:$0xff]
        %v233 = vld [vmem:[%s198 + $0x38] sm:$0xff]
        %v234 = vld [vmem:[%s198 + $0x40] sm:$0xff]
        %v235 = vld [vmem:[%s198 + $0x48] sm:$0xff]
        %v236 = vld [vmem:[%s198 + $0x50] sm:$0xff]
        %v237 = vld [vmem:[%s198 + $0x58] sm:$0xff]
        %v238 = vld [vmem:[%s198 + $0x60] sm:$0xff]
        %v239 = vld [vmem:[%s198 + $0x68] sm:$0xff]
        %v240 = vld [vmem:[%s198 + $0x70] sm:$0xff]
        %v241 = vld [vmem:[%s198 + $0x78] sm:$0xff]
        %v242 = vld [vmem:[#allocation8] sm:$0xff]
        %243 = vmatpush.msra.mxu0 %v241
        %244 = vmatpush.msra.mxu0 %v240
        %245 = vmatpush.msra.mxu0 %v239
        %246 = vmatpush.msra.mxu0 %v238
        %247 = vmatpush.msra.mxu0 %v237
        %248 = vmatpush.msra.mxu0 %v236
        %249 = vmatpush.msra.mxu0 %v235
        %250 = vmatpush.msra.mxu0 %v234
        %251 = vmatpush.msra.mxu0 %v233
        %252 = vmatpush.msra.mxu0 %v232
        %253 = vmatpush.msra.mxu0 %v231
        %254 = vmatpush.msra.mxu0 %v230
        %255 = vmatpush.msra.mxu0 %v229
        %256 = vmatpush.msra.mxu0 %v228
        %257 = vmatpush.msra.mxu0 %v227
        %258 = vmatpush.msra.mxu0 %v226
        %259 = vmatmul.f32.gmra.mxu0 %v242
        %v260 = vpop.f32.mrf.mxu0
        %v261 = vadd.f32 0.0, %v260
        %262 = vdwg.mxu0
        %263 = vst [vmem:[#allocation8] sm:$0xff] %v261
        %264 = vadd.xlane.f32.xlu0 %v261
        %v265 = vpop.xlane.xlu0 %264
        %v266 = vrot.slane %v265, 4
        %v267 = vadd.f32 %v265, %v266
        %v268 = vrot.slane %v267, 2
        %v269 = vadd.f32 %v267, %v268
        %v270 = vrot.slane %v269, 1
        %v271 = vadd.f32 %v269, %v270
        %s272 = vtos %v271
        %v273 = vmul.f32 %v261, %v261
        %274 = vadd.xlane.f32.xlu0 %v273
        %v275 = vpop.xlane.xlu0 %274
        %v276 = vrot.slane %v275, 4
        %v277 = vadd.f32 %v275, %v276
        %v278 = vrot.slane %v277, 2
        %v279 = vadd.f32 %v277, %v278
        %v280 = vrot.slane %v279, 1
        %v281 = vadd.f32 %v279, %v280
        %s282 = vtos %v281
        %v283 = vrcp.pop 1024.0
        %v284 = vmul.f32 1024.0, %v283
        %v285 = vsub.f32 1.0, %v284
        %v286 = vmul.f32 %v283, %v285
        %v287 = vadd.f32 %v283, %v286
        %vm288 = vweird.f32 %v283
        %v289 = vsel %vm288, %v283, %v287
        %s290 = vtos %v289
        %s291 = smul.f32 %s272, %s290
        %s292 = smul.f32 %s291, 1024.0
        %s293 = smul.f32 %s292, %s291
        %s294 = ssub.f32 %s282, %s293
        %v295 = vrcp.pop 1023.0
        %v296 = vmul.f32 1023.0, %v295
        %v297 = vsub.f32 1.0, %v296
        %v298 = vmul.f32 %v295, %v297
        %v299 = vadd.f32 %v295, %v298
        %vm300 = vweird.f32 %v295
        %v301 = vsel %vm300, %v295, %v299
        %s302 = vtos %v301
        %s303 = smul.f32 %s294, %s302
        %s304 = smul.u32 %s23, 4
        %s305 = scalar_lea.smem [#allocation9], %s304
        %306 = sst [smem:[%s305]] %s291
        %v307 = vstv %s303
        %v308 = vrsqrt.pop %v307
        %v309 = vmul.f32 %v308, %v307
        %v310 = vmul.f32 %v309, %v308
        %v311 = vmul.f32 0.5, %v310
        %v312 = vsub.f32 1.5, %v311
        %v313 = vmul.f32 %v308, %v312
        %v314 = vmul.f32 %v307, %v313
        %vm315 = vcmp.eq.f32.partialorder %v307, inf
        %v316 = vsel %vm315, %v307, %v314
        %vm317 = vcmp.eq.f32.partialorder %v307, 0.0
        %v318 = vand.u32 %v307, 2147483648
        %v319 = vsel %vm317, %v318, %v316
        %s320 = vtos %v319
        %s321 = scalar_lea.smem [#allocation10], %s304
        %322 = sst [smem:[%s321]] %s320
        %s323 = scalar_lea.vmem %s198, 128 [#allocation6]
        %v324 = vld [vmem:[%s323] sm:$0xff]
        %v325 = vld [vmem:[%s323 + $0x8] sm:$0xff]
        %v326 = vld [vmem:[%s323 + $0x10] sm:$0xff]
        %v327 = vld [vmem:[%s323 + $0x18] sm:$0xff]
        %v328 = vld [vmem:[%s323 + $0x20] sm:$0xff]
        %v329 = vld [vmem:[%s323 + $0x28] sm:$0xff]
        %v330 = vld [vmem:[%s323 + $0x30] sm:$0xff]
        %v331 = vld [vmem:[%s323 + $0x38] sm:$0xff]
        %v332 = vld [vmem:[%s323 + $0x40] sm:$0xff]
        %v333 = vld [vmem:[%s323 + $0x48] sm:$0xff]
        %v334 = vld [vmem:[%s323 + $0x50] sm:$0xff]
        %v335 = vld [vmem:[%s323 + $0x58] sm:$0xff]
        %v336 = vld [vmem:[%s323 + $0x60] sm:$0xff]
        %v337 = vld [vmem:[%s323 + $0x68] sm:$0xff]
        %v338 = vld [vmem:[%s323 + $0x70] sm:$0xff]
        %v339 = vld [vmem:[%s323 + $0x78] sm:$0xff]
        %v340 = vld [vmem:[#allocation8] sm:$0xff]
        %341 = vmatpush.msra.mxu0 %v339
        %342 = vmatpush.msra.mxu0 %v338
        %343 = vmatpush.msra.mxu0 %v337
        %344 = vmatpush.msra.mxu0 %v336
        %345 = vmatpush.msra.mxu0 %v335
        %346 = vmatpush.msra.mxu0 %v334
        %347 = vmatpush.msra.mxu0 %v333
        %348 = vmatpush.msra.mxu0 %v332
        %349 = vmatpush.msra.mxu0 %v331
        %350 = vmatpush.msra.mxu0 %v330
        %351 = vmatpush.msra.mxu0 %v329
        %352 = vmatpush.msra.mxu0 %v328
        %353 = vmatpush.msra.mxu0 %v327
        %354 = vmatpush.msra.mxu0 %v326
        %355 = vmatpush.msra.mxu0 %v325
        %356 = vmatpush.msra.mxu0 %v324
        %357 = vmatmul.f32.gmra.mxu0 %v340
        %v358 = vpop.f32.mrf.mxu0
        %v359 = vadd.f32 0.0, %v358
        %360 = vdwg.mxu0
        %361 = vst [vmem:[#allocation8] sm:$0xff] %v359
        %362 = vadd.xlane.f32.xlu0 %v359
        %v363 = vpop.xlane.xlu0 %362
        %v364 = vrot.slane %v363, 4
        %v365 = vadd.f32 %v363, %v364
        %v366 = vrot.slane %v365, 2
        %v367 = vadd.f32 %v365, %v366
        %v368 = vrot.slane %v367, 1
        %v369 = vadd.f32 %v367, %v368
        %s370 = vtos %v369
        %v371 = vmul.f32 %v359, %v359
        %372 = vadd.xlane.f32.xlu0 %v371
        %v373 = vpop.xlane.xlu0 %372
        %v374 = vrot.slane %v373, 4
        %v375 = vadd.f32 %v373, %v374
        %v376 = vrot.slane %v375, 2
        %v377 = vadd.f32 %v375, %v376
        %v378 = vrot.slane %v377, 1
        %v379 = vadd.f32 %v377, %v378
        %s380 = vtos %v379
        %v381 = vrcp.pop 1024.0
        %v382 = vmul.f32 1024.0, %v381
        %v383 = vsub.f32 1.0, %v382
        %v384 = vmul.f32 %v381, %v383
        %v385 = vadd.f32 %v381, %v384
        %vm386 = vweird.f32 %v381
        %v387 = vsel %vm386, %v381, %v385
        %s388 = vtos %v387
        %s389 = smul.f32 %s370, %s388
        %s390 = smul.f32 %s389, 1024.0
        %s391 = smul.f32 %s390, %s389
        %s392 = ssub.f32 %s380, %s391
        %v393 = vrcp.pop 1023.0
        %v394 = vmul.f32 1023.0, %v393
        %v395 = vsub.f32 1.0, %v394
        %v396 = vmul.f32 %v393, %v395
        %v397 = vadd.f32 %v393, %v396
        %vm398 = vweird.f32 %v393
        %v399 = vsel %vm398, %v393, %v397
        %s400 = vtos %v399
        %s401 = smul.f32 %s392, %s400
        %s402 = sadd.s32 %s304, 1
        %s403 = scalar_lea.smem [#allocation9], %s402
        %404 = sst [smem:[%s403]] %s389
        %v405 = vstv %s401
        %v406 = vrsqrt.pop %v405
        %v407 = vmul.f32 %v406, %v405
        %v408 = vmul.f32 %v407, %v406
        %v409 = vmul.f32 0.5, %v408
        %v410 = vsub.f32 1.5, %v409
        %v411 = vmul.f32 %v406, %v410
        %v412 = vmul.f32 %v405, %v411
        %vm413 = vcmp.eq.f32.partialorder %v405, inf
        %v414 = vsel %vm413, %v405, %v412
        %vm415 = vcmp.eq.f32.partialorder %v405, 0.0
        %v416 = vand.u32 %v405, 2147483648
        %v417 = vsel %vm415, %v416, %v414
        %s418 = vtos %v417
        %s419 = scalar_lea.smem [#allocation10], %s402
        %420 = sst [smem:[%s419]] %s418
        %s421 = scalar_lea.vmem %s198, 256 [#allocation6]
        %v422 = vld [vmem:[%s421] sm:$0xff]
        %v423 = vld [vmem:[%s421 + $0x8] sm:$0xff]
        %v424 = vld [vmem:[%s421 + $0x10] sm:$0xff]
        %v425 = vld [vmem:[%s421 + $0x18] sm:$0xff]
        %v426 = vld [vmem:[%s421 + $0x20] sm:$0xff]
        %v427 = vld [vmem:[%s421 + $0x28] sm:$0xff]
        %v428 = vld [vmem:[%s421 + $0x30] sm:$0xff]
        %v429 = vld [vmem:[%s421 + $0x38] sm:$0xff]
        %v430 = vld [vmem:[%s421 + $0x40] sm:$0xff]
        %v431 = vld [vmem:[%s421 + $0x48] sm:$0xff]
        %v432 = vld [vmem:[%s421 + $0x50] sm:$0xff]
        %v433 = vld [vmem:[%s421 + $0x58] sm:$0xff]
        %v434 = vld [vmem:[%s421 + $0x60] sm:$0xff]
        %v435 = vld [vmem:[%s421 + $0x68] sm:$0xff]
        %v436 = vld [vmem:[%s421 + $0x70] sm:$0xff]
        %v437 = vld [vmem:[%s421 + $0x78] sm:$0xff]
        %v438 = vld [vmem:[#allocation8] sm:$0xff]
        %439 = vmatpush.msra.mxu0 %v437
        %440 = vmatpush.msra.mxu0 %v436
        %441 = vmatpush.msra.mxu0 %v435
        %442 = vmatpush.msra.mxu0 %v434
        %443 = vmatpush.msra.mxu0 %v433
        %444 = vmatpush.msra.mxu0 %v432
        %445 = vmatpush.msra.mxu0 %v431
        %446 = vmatpush.msra.mxu0 %v430
        %447 = vmatpush.msra.mxu0 %v429
        %448 = vmatpush.msra.mxu0 %v428
        %449 = vmatpush.msra.mxu0 %v427
        %450 = vmatpush.msra.mxu0 %v426
        %451 = vmatpush.msra.mxu0 %v425
        %452 = vmatpush.msra.mxu0 %v424
        %453 = vmatpush.msra.mxu0 %v423
        %454 = vmatpush.msra.mxu0 %v422
        %455 = vmatmul.f32.gmra.mxu0 %v438
        %v456 = vpop.f32.mrf.mxu0
        %v457 = vadd.f32 0.0, %v456
        %458 = vdwg.mxu0
        %459 = vst [vmem:[#allocation8] sm:$0xff] %v457
        %460 = vadd.xlane.f32.xlu0 %v457
        %v461 = vpop.xlane.xlu0 %460
        %v462 = vrot.slane %v461, 4
        %v463 = vadd.f32 %v461, %v462
        %v464 = vrot.slane %v463, 2
        %v465 = vadd.f32 %v463, %v464
        %v466 = vrot.slane %v465, 1
        %v467 = vadd.f32 %v465, %v466
        %s468 = vtos %v467
        %v469 = vmul.f32 %v457, %v457
        %470 = vadd.xlane.f32.xlu0 %v469
        %v471 = vpop.xlane.xlu0 %470
        %v472 = vrot.slane %v471, 4
        %v473 = vadd.f32 %v471, %v472
        %v474 = vrot.slane %v473, 2
        %v475 = vadd.f32 %v473, %v474
        %v476 = vrot.slane %v475, 1
        %v477 = vadd.f32 %v475, %v476
        %s478 = vtos %v477
        %v479 = vrcp.pop 1024.0
        %v480 = vmul.f32 1024.0, %v479
        %v481 = vsub.f32 1.0, %v480
        %v482 = vmul.f32 %v479, %v481
        %v483 = vadd.f32 %v479, %v482
        %vm484 = vweird.f32 %v479
        %v485 = vsel %vm484, %v479, %v483
        %s486 = vtos %v485
        %s487 = smul.f32 %s468, %s486
        %s488 = smul.f32 %s487, 1024.0
        %s489 = smul.f32 %s488, %s487
        %s490 = ssub.f32 %s478, %s489
        %v491 = vrcp.pop 1023.0
        %v492 = vmul.f32 1023.0, %v491
        %v493 = vsub.f32 1.0, %v492
        %v494 = vmul.f32 %v491, %v493
        %v495 = vadd.f32 %v491, %v494
        %vm496 = vweird.f32 %v491
        %v497 = vsel %vm496, %v491, %v495
        %s498 = vtos %v497
        %s499 = smul.f32 %s490, %s498
        %s500 = sadd.s32 %s304, 2
        %s501 = scalar_lea.smem [#allocation9], %s500
        %502 = sst [smem:[%s501]] %s487
        %v503 = vstv %s499
        %v504 = vrsqrt.pop %v503
        %v505 = vmul.f32 %v504, %v503
        %v506 = vmul.f32 %v505, %v504
        %v507 = vmul.f32 0.5, %v506
        %v508 = vsub.f32 1.5, %v507
        %v509 = vmul.f32 %v504, %v508
        %v510 = vmul.f32 %v503, %v509
        %vm511 = vcmp.eq.f32.partialorder %v503, inf
        %v512 = vsel %vm511, %v503, %v510
        %vm513 = vcmp.eq.f32.partialorder %v503, 0.0
        %v514 = vand.u32 %v503, 2147483648
        %v515 = vsel %vm513, %v514, %v512
        %s516 = vtos %v515
        %s517 = scalar_lea.smem [#allocation10], %s500
        %518 = sst [smem:[%s517]] %s516
        %s519 = scalar_lea.vmem %s198, 384 [#allocation6]
        %v520 = vld [vmem:[%s519] sm:$0xff]
        %v521 = vld [vmem:[%s519 + $0x8] sm:$0xff]
        %v522 = vld [vmem:[%s519 + $0x10] sm:$0xff]
        %v523 = vld [vmem:[%s519 + $0x18] sm:$0xff]
        %v524 = vld [vmem:[%s519 + $0x20] sm:$0xff]
        %v525 = vld [vmem:[%s519 + $0x28] sm:$0xff]
        %v526 = vld [vmem:[%s519 + $0x30] sm:$0xff]
        %v527 = vld [vmem:[%s519 + $0x38] sm:$0xff]
        %v528 = vld [vmem:[%s519 + $0x40] sm:$0xff]
        %v529 = vld [vmem:[%s519 + $0x48] sm:$0xff]
        %v530 = vld [vmem:[%s519 + $0x50] sm:$0xff]
        %v531 = vld [vmem:[%s519 + $0x58] sm:$0xff]
        %v532 = vld [vmem:[%s519 + $0x60] sm:$0xff]
        %v533 = vld [vmem:[%s519 + $0x68] sm:$0xff]
        %v534 = vld [vmem:[%s519 + $0x70] sm:$0xff]
        %v535 = vld [vmem:[%s519 + $0x78] sm:$0xff]
        %v536 = vld [vmem:[#allocation8] sm:$0xff]
        %537 = vmatpush.msra.mxu0 %v535
        %538 = vmatpush.msra.mxu0 %v534
        %539 = vmatpush.msra.mxu0 %v533
        %540 = vmatpush.msra.mxu0 %v532
        %541 = vmatpush.msra.mxu0 %v531
        %542 = vmatpush.msra.mxu0 %v530
        %543 = vmatpush.msra.mxu0 %v529
        %544 = vmatpush.msra.mxu0 %v528
        %545 = vmatpush.msra.mxu0 %v527
        %546 = vmatpush.msra.mxu0 %v526
        %547 = vmatpush.msra.mxu0 %v525
        %548 = vmatpush.msra.mxu0 %v524
        %549 = vmatpush.msra.mxu0 %v523
        %550 = vmatpush.msra.mxu0 %v522
        %551 = vmatpush.msra.mxu0 %v521
        %552 = vmatpush.msra.mxu0 %v520
        %553 = vmatmul.f32.gmra.mxu0 %v536
        %v554 = vpop.f32.mrf.mxu0
        %v555 = vadd.f32 0.0, %v554
        %556 = vdwg.mxu0
        %557 = vst [vmem:[#allocation8] sm:$0xff] %v555
        %558 = vadd.xlane.f32.xlu0 %v555
        %v559 = vpop.xlane.xlu0 %558
        %v560 = vrot.slane %v559, 4
        %v561 = vadd.f32 %v559, %v560
        %v562 = vrot.slane %v561, 2
        %v563 = vadd.f32 %v561, %v562
        %v564 = vrot.slane %v563, 1
        %v565 = vadd.f32 %v563, %v564
        %s566 = vtos %v565
        %v567 = vmul.f32 %v555, %v555
        %568 = vadd.xlane.f32.xlu0 %v567
        %v569 = vpop.xlane.xlu0 %568
        %v570 = vrot.slane %v569, 4
        %v571 = vadd.f32 %v569, %v570
        %v572 = vrot.slane %v571, 2
        %v573 = vadd.f32 %v571, %v572
        %v574 = vrot.slane %v573, 1
        %v575 = vadd.f32 %v573, %v574
        %s576 = vtos %v575
        %v577 = vrcp.pop 1024.0
        %v578 = vmul.f32 1024.0, %v577
        %v579 = vsub.f32 1.0, %v578
        %v580 = vmul.f32 %v577, %v579
        %v581 = vadd.f32 %v577, %v580
        %vm582 = vweird.f32 %v577
        %v583 = vsel %vm582, %v577, %v581
        %s584 = vtos %v583
        %s585 = smul.f32 %s566, %s584
        %s586 = smul.f32 %s585, 1024.0
        %s587 = smul.f32 %s586, %s585
        %s588 = ssub.f32 %s576, %s587
        %v589 = vrcp.pop 1023.0
        %v590 = vmul.f32 1023.0, %v589
        %v591 = vsub.f32 1.0, %v590
        %v592 = vmul.f32 %v589, %v591
        %v593 = vadd.f32 %v589, %v592
        %vm594 = vweird.f32 %v589
        %v595 = vsel %vm594, %v589, %v593
        %s596 = vtos %v595
        %s597 = smul.f32 %s588, %s596
        %s598 = sadd.s32 %s304, 3
        %s599 = scalar_lea.smem [#allocation9], %s598
        %600 = sst [smem:[%s599]] %s585
        %v601 = vstv %s597
        %v602 = vrsqrt.pop %v601
        %v603 = vmul.f32 %v602, %v601
        %v604 = vmul.f32 %v603, %v602
        %v605 = vmul.f32 0.5, %v604
        %v606 = vsub.f32 1.5, %v605
        %v607 = vmul.f32 %v602, %v606
        %v608 = vmul.f32 %v601, %v607
        %vm609 = vcmp.eq.f32.partialorder %v601, inf
        %v610 = vsel %vm609, %v601, %v608
        %vm611 = vcmp.eq.f32.partialorder %v601, 0.0
        %v612 = vand.u32 %v601, 2147483648
        %v613 = vsel %vm611, %v612, %v610
        %s614 = vtos %v613
        %s615 = scalar_lea.smem [#allocation10], %s598
        %616 = sst [smem:[%s615]] %s614
        // Predicated region
        $region41: #{tpu_custom_call.1} parent=27 // pred_check
          %p617 = pneg %p83
        $region42: #{tpu_custom_call.1} parent=27 // pred_check_branch
          %619 = sbr.rel (%p617) target = $region44
        $region43: #{tpu_custom_call.1} parent=27 // pred_region
          %621 = vsyncadd [#allocation4], 0
          %s623 = sshll.u32 [#allocation8], 4
          %s624 = int_to_ptr.vmem [resolvable:$true] %s623
          %s625 = sshll.u32 %s2, 4
          %s626 = int_to_ptr.hbm [resolvable:$true] %s625
          %628 = dma.vmem_to_hbm [thread:$0]  %s624, 128, %s626, [#allocation4]
        $region44: #{tpu_custom_call.1} parent=27 // pred_fallthru
          _
        // Predicated region
        $region45: #{tpu_custom_call.1} parent=27 // pred_check
          %p629 = pneg %p104
        $region46: #{tpu_custom_call.1} parent=27 // pred_check_branch
          %631 = sbr.rel (%p629) target = $region48
        $region47: #{tpu_custom_call.1} parent=27 // pred_region
          %633 = vsyncadd [#allocation5], 0
          %s635 = sshll.u32 %s3, 4
          %s636 = int_to_ptr.hbm [resolvable:$true] %s635
          %638 = dma.smem_to_hbm [#allocation9], 16, %s636, [#allocation5]
        $region48: #{tpu_custom_call.1} parent=27 // pred_fallthru
          _
        // Predicated region
        $region49: #{tpu_custom_call.1} parent=27 // pred_check
          %p639 = pneg %p125
        $region50: #{tpu_custom_call.1} parent=27 // pred_check_branch
          %641 = sbr.rel (%p639) target = $region52
        $region51: #{tpu_custom_call.1} parent=27 // pred_region
          %643 = vsyncadd [#allocation11], 0
          %s645 = sshll.u32 %s4, 4
          %s646 = int_to_ptr.hbm [resolvable:$true] %s645
          %648 = dma.smem_to_hbm [#allocation10], 16, %s646, [#allocation11]
        $region52: #{tpu_custom_call.1} parent=27 // pred_fallthru
          _
        // Predicated region
        $region53: #{tpu_custom_call.1} parent=27 // pred_check
          %p649 = pneg %p83
        $region54: #{tpu_custom_call.1} parent=27 // pred_check_branch
          %651 = sbr.rel (%p649) target = $region56
        $region55: #{tpu_custom_call.1} parent=27 // pred_region
          %653 = dma.done [#allocation4], 128
        $region56: #{tpu_custom_call.1} parent=27 // pred_fallthru
          _
        // Predicated region
        $region57: #{tpu_custom_call.1} parent=27 // pred_check
          %p654 = pneg %p104
        $region58: #{tpu_custom_call.1} parent=27 // pred_check_branch
          %656 = sbr.rel (%p654) target = $region60
        $region59: #{tpu_custom_call.1} parent=27 // pred_region
          %658 = dma.done [#allocation5], 16
        $region60: #{tpu_custom_call.1} parent=27 // pred_fallthru
          _
        // Predicated region
        $region61: #{tpu_custom_call.1} parent=27 // pred_check
          %p659 = pneg %p125
        $region62: #{tpu_custom_call.1} parent=27 // pred_check_branch
          %661 = sbr.rel (%p659) target = $region64
        $region63: #{tpu_custom_call.1} parent=27 // pred_region
          %663 = dma.done [#allocation11], 16
        $region64: #{tpu_custom_call.1} parent=27 // pred_fallthru
          _
        %664 = sfence
      $region28: #{tpu_custom_call.1} parent=5 // pred_fallthru
        _
      %p665 = scmp.le.s32.totalorder 2, %s18
      // Predicated region
      $region65: #{tpu_custom_call.1} parent=5 // pred_check
        %p666 = pneg %p665
      $region66: #{tpu_custom_call.1} parent=5 // pred_check_branch
        %668 = sbr.rel (%p666) target = $region68
      $region67: #{tpu_custom_call.1} parent=5 // pred_region
        %s669 = ssub.s32 %s18, 2
      $region68: #{tpu_custom_call.1} parent=5 // pred_fallthru
        _
    $region6: #{tpu_custom_call.1} parent=1 // loop_footer
      %s22 = sadd.s32 1, %s18
    $region7: #{tpu_custom_call.1} parent=1 // loop_footer_branch
      %17 = sbr.rel target = $region3
    $region8: #{tpu_custom_call.1} parent=1 // loop_exit
      _
    %670 = vsyncpa [#allocation3], 1
    %s671 = scalar_lea.sflag [#allocation3], 1
    %672 = vsyncpa %s671, 1
    %673 = vsyncpa [#allocation7], 1
    %s674 = scalar_lea.sflag [#allocation7], 1
    %675 = vsyncpa %s674, 1
    %676 = vsyncpa [#allocation4], 1
    %s677 = scalar_lea.sflag [#allocation4], 1
    %678 = vsyncpa %s677, 1
    %679 = vsyncpa [#allocation5], 1
    %s680 = scalar_lea.sflag [#allocation5], 1
    %681 = vsyncpa %s680, 1
    %682 = vsyncpa [#allocation11], 1

</llo_original>
